<compile_context>
chip_gen: v7x
topology: tpu7x:2x2x1
jax: 0.10.0
libtpu: 0.0.40
codegen_flags: <defaults>
</compile_context>

<pallas_src>
import jax
import jax.numpy as jnp
from jax import lax
from jax.experimental import pallas as pl
from jax.experimental.pallas import tpu as pltpu


def _round_up(x, m):
    return (x + m - 1) // m * m


def _rnn_seq_kernel(x_ref, wcat_ref, b_ref, out_ref, h_scr):
    """Full-sequence Elman RNN for one batch tile.

    h_t = tanh([x_t | h_{t-1}] @ W_cat + b)   with W_cat = [W_ih^T ; W_hh^T]

    x_ref    : (S, TB, Dp)      seq-major embedded inputs (zero padded on D)
    wcat_ref : (Dp + Hp, Hp)    fused weight, zero padded
    b_ref    : (1, Hp)          b_ih + b_hh, zero padded
    out_ref  : (S, TB, Hp)      per-timestep hidden states (lane-dense block)
    h_scr    : (TB, Hp) f32     recurrent state carried across the time loop
    """
    nsteps = x_ref.shape[0]
    h_scr[...] = jnp.zeros_like(h_scr)   # PyTorch default h_0 = 0

    def step(t, carry):
        x_t = x_ref[t]                                        # (TB, Dp)
        xh = jnp.concatenate([x_t, h_scr[...]], axis=-1)      # (TB, Dp+Hp)
        h_new = jnp.tanh(
            jnp.dot(xh, wcat_ref[...], preferred_element_type=jnp.float32)
            + b_ref[...]
        )
        h_scr[...] = h_new
        out_ref[t] = h_new.astype(out_ref.dtype)   # VMEM row store; HBM
        return carry                               # writeback happens once

    lax.fori_loop(0, nsteps, step, 0, unroll=nsteps <= 16)


def rnn_forward_pallas(x_sbd, w_ih, w_hh, b_ih, b_hh, batch):
    """x_sbd: (S, Bp, D) seq-major embedded inputs, batch already padded to a
    multiple of 8. w_ih: (H, D), w_hh: (H, H), b_ih/b_hh: (H,) (PyTorch shapes).
    Returns output (batch, S, H) and hidden (1, batch, H)."""
    S, Bp, D = x_sbd.shape
    H = w_ih.shape[0]

    Dp = _round_up(D, 128)   # lane-align the [x | h] split point
    Hp = _round_up(H, 128)   # lane-dense hidden/output (unmasked vst)
    TB = 8                   # sublane-aligned batch tile; 'parallel' grid axis

    if Dp != D:
        x_sbd = jnp.pad(x_sbd, ((0, 0), (0, 0), (0, Dp - D)))
    x_sbd = x_sbd.astype(jnp.float32)

    # Fused weight: rows [0:D] = W_ih^T, rows [Dp:Dp+H] = W_hh^T, rest zero.
    # Kept f32 for exact parity with the PyTorch module.
    # TODO(synk): bf16 weights (f32 accumulate) would feed the v6e/v7x MXU at
    # full rate; kept f32 here for numerical fidelity.
    wcat = jnp.zeros((Dp + Hp, Hp), jnp.float32)
    wcat = wcat.at[:D, :H].set(w_ih.T.astype(jnp.float32))
    wcat = wcat.at[Dp:Dp + H, :H].set(w_hh.T.astype(jnp.float32))
    bcat = jnp.zeros((1, Hp), jnp.float32).at[0, :H].set(
        (b_ih + b_hh).astype(jnp.float32))

    out_sbh = pl.pallas_call(
        _rnn_seq_kernel,
        out_shape=jax.ShapeDtypeStruct((S, Bp, Hp), jnp.float32),
        grid_spec=pltpu.PrefetchScalarGridSpec(
            num_scalar_prefetch=0,
            grid=(Bp // TB,),                    # batch tiles only; time is an
            in_specs=[                           # in-kernel fori_loop
                pl.BlockSpec((S, TB, Dp), lambda b: (0, b, 0)),   # x slab
                pl.BlockSpec((Dp + Hp, Hp), lambda b: (0, 0)),    # W_cat
                pl.BlockSpec((1, Hp), lambda b: (0, 0)),          # bias
            ],
            out_specs=pl.BlockSpec((S, TB, Hp), lambda b: (0, b, 0)),
            scratch_shapes=[pltpu.VMEM((TB, Hp), jnp.float32)],
        ),
        compiler_params=pltpu.CompilerParams(
            dimension_semantics=("parallel",),   # batch tiles are independent
        ),
    )(x_sbd, wcat, bcat)

    output = jnp.transpose(out_sbh[:, :batch, :H], (1, 0, 2))   # (B, S, H)
    hidden = out_sbh[S - 1, :batch, :H][None, :, :]             # (1, B, H)
    return output, hidden


def encoder_rnn_forward(token_ids, params):
    """Full EncoderRNN forward.

    token_ids: (B, S) int32 vocab indices.
    Embedding lookup is a seq-major gather (no (B,S,D)->(S,B,D) activation
    transpose needed); the recurrence runs in one Pallas kernel invocation per
    batch tile. Dropout is applied in eval mode (identity).
    """
    B, S = token_ids.shape
    H = params["w_ih"].shape[0]
    if S == 0:  # empty sequence: nn.RNN would return h_0 = 0
        return (jnp.zeros((B, 0, H), jnp.float32),
                jnp.zeros((1, B, H), jnp.float32))

    Bp = _round_up(B, 8)
    ids_p = jnp.pad(token_ids, ((0, Bp - B), (0, 0)))  # pad rows with idx 0;
    # padded batch rows are computed but discarded (rows are independent).
    embedded = jnp.take(params["embedding"], ids_p.T, axis=0)   # (S, Bp, D)
    # TODO(synk): training-mode dropout (p=0.1) omitted; eval mode == identity.
    return rnn_forward_pallas(
        embedded,
        params["w_ih"], params["w_hh"], params["b_ih"], params["b_hh"],
        batch=B,
    )


def init_params(key, vocab_size, input_size, hidden_size):
    k1, k2, k3, k4, k5 = jax.random.split(key, 5)
    scale = 1.0 / jnp.sqrt(hidden_size)
    return {
        "embedding": jax.random.normal(k1, (vocab_size, input_size), jnp.float32) * 0.1,
        "w_ih": jax.random.uniform(k2, (hidden_size, input_size), jnp.float32,
                                   -scale, scale),
        "w_hh": jax.random.uniform(k3, (hidden_size, hidden_size), jnp.float32,
                                   -scale, scale),
        "b_ih": jax.random.uniform(k4, (hidden_size,), jnp.float32, -scale, scale),
        "b_hh": jax.random.uniform(k5, (hidden_size,), jnp.float32, -scale, scale),
    }


if __name__ == "__main__":
    VOCAB, D_IN, H = 50, 16, 32
    B, S = 2, 8

    key = jax.random.PRNGKey(0)
    kp, kx = jax.random.split(key)
    params = init_params(kp, VOCAB, D_IN, H)
    token_ids = jax.random.randint(kx, (B, S), 0, VOCAB, dtype=jnp.int32)

    output, hidden = encoder_rnn_forward(token_ids, params)
    output = jax.block_until_ready(output)
    hidden = jax.block_until_ready(hidden)

    assert output.shape == (B, S, H)
    assert hidden.shape == (1, B, H)

    # Quick correctness check against a pure-JAX reference recurrence.
    emb = jnp.take(params["embedding"], token_ids, axis=0)

    def ref_rnn(x):
        def step(h, x_t):
            h_new = jnp.tanh(x_t @ params["w_ih"].T + params["b_ih"]
                             + h @ params["w_hh"].T + params["b_hh"])
            return h_new, h_new
        h0 = jnp.zeros((B, H), jnp.float32)
        h_last, outs = jax.lax.scan(step, h0, jnp.transpose(x, (1, 0, 2)))
        return jnp.transpose(outs, (1, 0, 2)), h_last[None]

    ref_out, ref_hid = ref_rnn(emb)
    assert jnp.allclose(output, ref_out, atol=1e-4, rtol=1e-4), \
        float(jnp.max(jnp.abs(output - ref_out)))
    assert jnp.allclose(hidden, ref_hid, atol=1e-4, rtol=1e-4)

    print("KERNEL_OK")
</pallas_src>

<mosaic_0001>
module attributes {stable_mosaic.version = 11 : i64} {
  func.func @_rnn_seq_kernel(%arg0: i32, %arg1: memref<8x8x128xf32, #tpu.memory_space<vmem>>, %arg2: memref<256x128xf32, #tpu.memory_space<vmem>>, %arg3: memref<1x128xf32, #tpu.memory_space<vmem>>, %arg4: memref<8x8x128xf32, #tpu.memory_space<vmem>>, %arg5: memref<8x128xf32, #tpu.memory_space<vmem>>) attributes {dimension_semantics = [#tpu.dimension_semantics<parallel>], iteration_bounds = array<i64: 1>, scalar_prefetch = 0 : i64, scratch_operands = 1 : i64, tpu.core_type = #tpu.core_type<tc>, window_params = [{transform_indices = @transform_0, window_bounds = array<i64: 8, 8, 128>}, {pipeline_mode = #tpu.pipeline_mode<synchronous>, transform_indices = @transform_1, window_bounds = array<i64: 256, 128>}, {pipeline_mode = #tpu.pipeline_mode<synchronous>, transform_indices = @transform_2, window_bounds = array<i64: 1, 128>}, {transform_indices = @transform_3, window_bounds = array<i64: 8, 8, 128>}]} {
    %cst = arith.constant 0.000000e+00 : f32
    %0 = vector.broadcast %cst : f32 to vector<8x128xf32>
    %c0 = arith.constant 0 : index
    %c0_0 = arith.constant 0 : index
    %1 = vector.load %arg5[%c0, %c0_0] : memref<8x128xf32, #tpu.memory_space<vmem>>, vector<8x128xf32>
    tpu.vector_store %arg5[%c0, %c0_0], %0 {strides = array<i32>} : memref<8x128xf32, #tpu.memory_space<vmem>>, vector<8x128xf32>,
    %c0_i32 = arith.constant 0 : i32
    %2 = arith.index_cast %c0_i32 : i32 to index
    %c0_1 = arith.constant 0 : index
    %c0_2 = arith.constant 0 : index
    %3 = vector.load %arg1[%2, %c0_1, %c0_2] : memref<8x8x128xf32, #tpu.memory_space<vmem>>, vector<1x8x128xf32>
    %4 = vector.shape_cast %3 : vector<1x8x128xf32> to vector<8x128xf32>
    %c0_3 = arith.constant 0 : index
    %c0_4 = arith.constant 0 : index
    %5 = vector.load %arg5[%c0_3, %c0_4] : memref<8x128xf32, #tpu.memory_space<vmem>>, vector<8x128xf32>
    %6 = tpu.concatenate %4, %5 in 1 : vector<8x128xf32>, vector<8x128xf32> -> vector<8x256xf32>
    %c0_5 = arith.constant 0 : index
    %c0_6 = arith.constant 0 : index
    %7 = vector.load %arg2[%c0_5, %c0_6] : memref<256x128xf32, #tpu.memory_space<vmem>>, vector<256x128xf32>
    %cst_7 = arith.constant dense<0.000000e+00> : vector<8x128xf32>
    %8 = tpu.matmul %6, %7, %cst_7 {dimension_numbers = #tpu.dot_dimension_numbers<[1], [0], [0], [1], [0, 0, 1, 1], [], []>} : vector<8x256xf32>, vector<256x128xf32>, vector<8x128xf32> -> vector<8x128xf32>
    %c0_8 = arith.constant 0 : index
    %c0_9 = arith.constant 0 : index
    %9 = vector.load %arg3[%c0_8, %c0_9] : memref<1x128xf32, #tpu.memory_space<vmem>>, vector<1x128xf32>
    %10 = vector.broadcast %9 : vector<1x128xf32> to vector<8x128xf32>
    %11 = arith.addf %8, %10 : vector<8x128xf32>
    %12 = math.tanh %11 : vector<8x128xf32>
    %c0_10 = arith.constant 0 : index
    %c0_11 = arith.constant 0 : index
    %13 = vector.load %arg5[%c0_10, %c0_11] : memref<8x128xf32, #tpu.memory_space<vmem>>, vector<8x128xf32>
    tpu.vector_store %arg5[%c0_10, %c0_11], %12 {strides = array<i32>} : memref<8x128xf32, #tpu.memory_space<vmem>>, vector<8x128xf32>,
    %14 = arith.index_cast %c0_i32 : i32 to index
    %c0_12 = arith.constant 0 : index
    %c0_13 = arith.constant 0 : index
    %15 = vector.load %arg4[%14, %c0_12, %c0_13] : memref<8x8x128xf32, #tpu.memory_space<vmem>>, vector<1x8x128xf32>
    %16 = vector.shape_cast %15 : vector<1x8x128xf32> to vector<8x128xf32>
    %17 = vector.shape_cast %12 : vector<8x128xf32> to vector<1x8x128xf32>
    tpu.vector_store %arg4[%14, %c0_12, %c0_13], %17 {strides = array<i32>} : memref<8x8x128xf32, #tpu.memory_space<vmem>>, vector<1x8x128xf32>,
    %c1_i32 = arith.constant 1 : i32
    %18 = arith.index_cast %c1_i32 : i32 to index
    %c0_14 = arith.constant 0 : index
    %c0_15 = arith.constant 0 : index
    %19 = vector.load %arg1[%18, %c0_14, %c0_15] : memref<8x8x128xf32, #tpu.memory_space<vmem>>, vector<1x8x128xf32>
    %20 = vector.shape_cast %19 : vector<1x8x128xf32> to vector<8x128xf32>
    %c0_16 = arith.constant 0 : index
    %c0_17 = arith.constant 0 : index
    %21 = vector.load %arg5[%c0_16, %c0_17] : memref<8x128xf32, #tpu.memory_space<vmem>>, vector<8x128xf32>
    %22 = tpu.concatenate %20, %21 in 1 : vector<8x128xf32>, vector<8x128xf32> -> vector<8x256xf32>
    %c0_18 = arith.constant 0 : index
    %c0_19 = arith.constant 0 : index
    %23 = vector.load %arg2[%c0_18, %c0_19] : memref<256x128xf32, #tpu.memory_space<vmem>>, vector<256x128xf32>
    %cst_20 = arith.constant dense<0.000000e+00> : vector<8x128xf32>
    %24 = tpu.matmul %22, %23, %cst_20 {dimension_numbers = #tpu.dot_dimension_numbers<[1], [0], [0], [1], [0, 0, 1, 1], [], []>} : vector<8x256xf32>, vector<256x128xf32>, vector<8x128xf32> -> vector<8x128xf32>
    %c0_21 = arith.constant 0 : index
    %c0_22 = arith.constant 0 : index
    %25 = vector.load %arg3[%c0_21, %c0_22] : memref<1x128xf32, #tpu.memory_space<vmem>>, vector<1x128xf32>
    %26 = vector.broadcast %25 : vector<1x128xf32> to vector<8x128xf32>
    %27 = arith.addf %24, %26 : vector<8x128xf32>
    %28 = math.tanh %27 : vector<8x128xf32>
    %c0_23 = arith.constant 0 : index
    %c0_24 = arith.constant 0 : index
    %29 = vector.load %arg5[%c0_23, %c0_24] : memref<8x128xf32, #tpu.memory_space<vmem>>, vector<8x128xf32>
    tpu.vector_store %arg5[%c0_23, %c0_24], %28 {strides = array<i32>} : memref<8x128xf32, #tpu.memory_space<vmem>>, vector<8x128xf32>,
    %30 = arith.index_cast %c1_i32 : i32 to index
    %c0_25 = arith.constant 0 : index
    %c0_26 = arith.constant 0 : index
    %31 = vector.load %arg4[%30, %c0_25, %c0_26] : memref<8x8x128xf32, #tpu.memory_space<vmem>>, vector<1x8x128xf32>
    %32 = vector.shape_cast %31 : vector<1x8x128xf32> to vector<8x128xf32>
    %33 = vector.shape_cast %28 : vector<8x128xf32> to vector<1x8x128xf32>
    tpu.vector_store %arg4[%30, %c0_25, %c0_26], %33 {strides = array<i32>} : memref<8x8x128xf32, #tpu.memory_space<vmem>>, vector<1x8x128xf32>,
    %c2_i32 = arith.constant 2 : i32
    %34 = arith.index_cast %c2_i32 : i32 to index
    %c0_27 = arith.constant 0 : index
    %c0_28 = arith.constant 0 : index
    %35 = vector.load %arg1[%34, %c0_27, %c0_28] : memref<8x8x128xf32, #tpu.memory_space<vmem>>, vector<1x8x128xf32>
    %36 = vector.shape_cast %35 : vector<1x8x128xf32> to vector<8x128xf32>
    %c0_29 = arith.constant 0 : index
    %c0_30 = arith.constant 0 : index
    %37 = vector.load %arg5[%c0_29, %c0_30] : memref<8x128xf32, #tpu.memory_space<vmem>>, vector<8x128xf32>
    %38 = tpu.concatenate %36, %37 in 1 : vector<8x128xf32>, vector<8x128xf32> -> vector<8x256xf32>
    %c0_31 = arith.constant 0 : index
    %c0_32 = arith.constant 0 : index
    %39 = vector.load %arg2[%c0_31, %c0_32] : memref<256x128xf32, #tpu.memory_space<vmem>>, vector<256x128xf32>
    %cst_33 = arith.constant dense<0.000000e+00> : vector<8x128xf32>
    %40 = tpu.matmul %38, %39, %cst_33 {dimension_numbers = #tpu.dot_dimension_numbers<[1], [0], [0], [1], [0, 0, 1, 1], [], []>} : vector<8x256xf32>, vector<256x128xf32>, vector<8x128xf32> -> vector<8x128xf32>
    %c0_34 = arith.constant 0 : index
    %c0_35 = arith.constant 0 : index
    %41 = vector.load %arg3[%c0_34, %c0_35] : memref<1x128xf32, #tpu.memory_space<vmem>>, vector<1x128xf32>
    %42 = vector.broadcast %41 : vector<1x128xf32> to vector<8x128xf32>
    %43 = arith.addf %40, %42 : vector<8x128xf32>
    %44 = math.tanh %43 : vector<8x128xf32>
    %c0_36 = arith.constant 0 : index
    %c0_37 = arith.constant 0 : index
    %45 = vector.load %arg5[%c0_36, %c0_37] : memref<8x128xf32, #tpu.memory_space<vmem>>, vector<8x128xf32>
    tpu.vector_store %arg5[%c0_36, %c0_37], %44 {strides = array<i32>} : memref<8x128xf32, #tpu.memory_space<vmem>>, vector<8x128xf32>,
    %46 = arith.index_cast %c2_i32 : i32 to index
    %c0_38 = arith.constant 0 : index
    %c0_39 = arith.constant 0 : index
    %47 = vector.load %arg4[%46, %c0_38, %c0_39] : memref<8x8x128xf32, #tpu.memory_space<vmem>>, vector<1x8x128xf32>
    %48 = vector.shape_cast %47 : vector<1x8x128xf32> to vector<8x128xf32>
    %49 = vector.shape_cast %44 : vector<8x128xf32> to vector<1x8x128xf32>
    tpu.vector_store %arg4[%46, %c0_38, %c0_39], %49 {strides = array<i32>} : memref<8x8x128xf32, #tpu.memory_space<vmem>>, vector<1x8x128xf32>,
    %c3_i32 = arith.constant 3 : i32
    %50 = arith.index_cast %c3_i32 : i32 to index
    %c0_40 = arith.constant 0 : index
    %c0_41 = arith.constant 0 : index
    %51 = vector.load %arg1[%50, %c0_40, %c0_41] : memref<8x8x128xf32, #tpu.memory_space<vmem>>, vector<1x8x128xf32>
    %52 = vector.shape_cast %51 : vector<1x8x128xf32> to vector<8x128xf32>
    %c0_42 = arith.constant 0 : index
    %c0_43 = arith.constant 0 : index
    %53 = vector.load %arg5[%c0_42, %c0_43] : memref<8x128xf32, #tpu.memory_space<vmem>>, vector<8x128xf32>
    %54 = tpu.concatenate %52, %53 in 1 : vector<8x128xf32>, vector<8x128xf32> -> vector<8x256xf32>
    %c0_44 = arith.constant 0 : index
    %c0_45 = arith.constant 0 : index
    %55 = vector.load %arg2[%c0_44, %c0_45] : memref<256x128xf32, #tpu.memory_space<vmem>>, vector<256x128xf32>
    %cst_46 = arith.constant dense<0.000000e+00> : vector<8x128xf32>
    %56 = tpu.matmul %54, %55, %cst_46 {dimension_numbers = #tpu.dot_dimension_numbers<[1], [0], [0], [1], [0, 0, 1, 1], [], []>} : vector<8x256xf32>, vector<256x128xf32>, vector<8x128xf32> -> vector<8x128xf32>
    %c0_47 = arith.constant 0 : index
    %c0_48 = arith.constant 0 : index
    %57 = vector.load %arg3[%c0_47, %c0_48] : memref<1x128xf32, #tpu.memory_space<vmem>>, vector<1x128xf32>
    %58 = vector.broadcast %57 : vector<1x128xf32> to vector<8x128xf32>
    %59 = arith.addf %56, %58 : vector<8x128xf32>
    %60 = math.tanh %59 : vector<8x128xf32>
    %c0_49 = arith.constant 0 : index
    %c0_50 = arith.constant 0 : index
    %61 = vector.load %arg5[%c0_49, %c0_50] : memref<8x128xf32, #tpu.memory_space<vmem>>, vector<8x128xf32>
    tpu.vector_store %arg5[%c0_49, %c0_50], %60 {strides = array<i32>} : memref<8x128xf32, #tpu.memory_space<vmem>>, vector<8x128xf32>,
    %62 = arith.index_cast %c3_i32 : i32 to index
    %c0_51 = arith.constant 0 : index
    %c0_52 = arith.constant 0 : index
    %63 = vector.load %arg4[%62, %c0_51, %c0_52] : memref<8x8x128xf32, #tpu.memory_space<vmem>>, vector<1x8x128xf32>
    %64 = vector.shape_cast %63 : vector<1x8x128xf32> to vector<8x128xf32>
    %65 = vector.shape_cast %60 : vector<8x128xf32> to vector<1x8x128xf32>
    tpu.vector_store %arg4[%62, %c0_51, %c0_52], %65 {strides = array<i32>} : memref<8x8x128xf32, #tpu.memory_space<vmem>>, vector<1x8x128xf32>,
    %c4_i32 = arith.constant 4 : i32
    %66 = arith.index_cast %c4_i32 : i32 to index
    %c0_53 = arith.constant 0 : index
    %c0_54 = arith.constant 0 : index
    %67 = vector.load %arg1[%66, %c0_53, %c0_54] : memref<8x8x128xf32, #tpu.memory_space<vmem>>, vector<1x8x128xf32>
    %68 = vector.shape_cast %67 : vector<1x8x128xf32> to vector<8x128xf32>
    %c0_55 = arith.constant 0 : index
    %c0_56 = arith.constant 0 : index
    %69 = vector.load %arg5[%c0_55, %c0_56] : memref<8x128xf32, #tpu.memory_space<vmem>>, vector<8x128xf32>
    %70 = tpu.concatenate %68, %69 in 1 : vector<8x128xf32>, vector<8x128xf32> -> vector<8x256xf32>
    %c0_57 = arith.constant 0 : index
    %c0_58 = arith.constant 0 : index
    %71 = vector.load %arg2[%c0_57, %c0_58] : memref<256x128xf32, #tpu.memory_space<vmem>>, vector<256x128xf32>
    %cst_59 = arith.constant dense<0.000000e+00> : vector<8x128xf32>
    %72 = tpu.matmul %70, %71, %cst_59 {dimension_numbers = #tpu.dot_dimension_numbers<[1], [0], [0], [1], [0, 0, 1, 1], [], []>} : vector<8x256xf32>, vector<256x128xf32>, vector<8x128xf32> -> vector<8x128xf32>
    %c0_60 = arith.constant 0 : index
    %c0_61 = arith.constant 0 : index
    %73 = vector.load %arg3[%c0_60, %c0_61] : memref<1x128xf32, #tpu.memory_space<vmem>>, vector<1x128xf32>
    %74 = vector.broadcast %73 : vector<1x128xf32> to vector<8x128xf32>
    %75 = arith.addf %72, %74 : vector<8x128xf32>
    %76 = math.tanh %75 : vector<8x128xf32>
    %c0_62 = arith.constant 0 : index
    %c0_63 = arith.constant 0 : index
    %77 = vector.load %arg5[%c0_62, %c0_63] : memref<8x128xf32, #tpu.memory_space<vmem>>, vector<8x128xf32>
    tpu.vector_store %arg5[%c0_62, %c0_63], %76 {strides = array<i32>} : memref<8x128xf32, #tpu.memory_space<vmem>>, vector<8x128xf32>,
    %78 = arith.index_cast %c4_i32 : i32 to index
    %c0_64 = arith.constant 0 : index
    %c0_65 = arith.constant 0 : index
    %79 = vector.load %arg4[%78, %c0_64, %c0_65] : memref<8x8x128xf32, #tpu.memory_space<vmem>>, vector<1x8x128xf32>
    %80 = vector.shape_cast %79 : vector<1x8x128xf32> to vector<8x128xf32>
    %81 = vector.shape_cast %76 : vector<8x128xf32> to vector<1x8x128xf32>
    tpu.vector_store %arg4[%78, %c0_64, %c0_65], %81 {strides = array<i32>} : memref<8x8x128xf32, #tpu.memory_space<vmem>>, vector<1x8x128xf32>,
    %c5_i32 = arith.constant 5 : i32
    %82 = arith.index_cast %c5_i32 : i32 to index
    %c0_66 = arith.constant 0 : index
    %c0_67 = arith.constant 0 : index
    %83 = vector.load %arg1[%82, %c0_66, %c0_67] : memref<8x8x128xf32, #tpu.memory_space<vmem>>, vector<1x8x128xf32>
    %84 = vector.shape_cast %83 : vector<1x8x128xf32> to vector<8x128xf32>
    %c0_68 = arith.constant 0 : index
    %c0_69 = arith.constant 0 : index
    %85 = vector.load %arg5[%c0_68, %c0_69] : memref<8x128xf32, #tpu.memory_space<vmem>>, vector<8x128xf32>
    %86 = tpu.concatenate %84, %85 in 1 : vector<8x128xf32>, vector<8x128xf32> -> vector<8x256xf32>
    %c0_70 = arith.constant 0 : index
    %c0_71 = arith.constant 0 : index
    %87 = vector.load %arg2[%c0_70, %c0_71] : memref<256x128xf32, #tpu.memory_space<vmem>>, vector<256x128xf32>
    %cst_72 = arith.constant dense<0.000000e+00> : vector<8x128xf32>
    %88 = tpu.matmul %86, %87, %cst_72 {dimension_numbers = #tpu.dot_dimension_numbers<[1], [0], [0], [1], [0, 0, 1, 1], [], []>} : vector<8x256xf32>, vector<256x128xf32>, vector<8x128xf32> -> vector<8x128xf32>
    %c0_73 = arith.constant 0 : index
    %c0_74 = arith.constant 0 : index
    %89 = vector.load %arg3[%c0_73, %c0_74] : memref<1x128xf32, #tpu.memory_space<vmem>>, vector<1x128xf32>
    %90 = vector.broadcast %89 : vector<1x128xf32> to vector<8x128xf32>
    %91 = arith.addf %88, %90 : vector<8x128xf32>
    %92 = math.tanh %91 : vector<8x128xf32>
    %c0_75 = arith.constant 0 : index
    %c0_76 = arith.constant 0 : index
    %93 = vector.load %arg5[%c0_75, %c0_76] : memref<8x128xf32, #tpu.memory_space<vmem>>, vector<8x128xf32>
    tpu.vector_store %arg5[%c0_75, %c0_76], %92 {strides = array<i32>} : memref<8x128xf32, #tpu.memory_space<vmem>>, vector<8x128xf32>,
    %94 = arith.index_cast %c5_i32 : i32 to index
    %c0_77 = arith.constant 0 : index
    %c0_78 = arith.constant 0 : index
    %95 = vector.load %arg4[%94, %c0_77, %c0_78] : memref<8x8x128xf32, #tpu.memory_space<vmem>>, vector<1x8x128xf32>
    %96 = vector.shape_cast %95 : vector<1x8x128xf32> to vector<8x128xf32>
    %97 = vector.shape_cast %92 : vector<8x128xf32> to vector<1x8x128xf32>
    tpu.vector_store %arg4[%94, %c0_77, %c0_78], %97 {strides = array<i32>} : memref<8x8x128xf32, #tpu.memory_space<vmem>>, vector<1x8x128xf32>,
    %c6_i32 = arith.constant 6 : i32
    %98 = arith.index_cast %c6_i32 : i32 to index
    %c0_79 = arith.constant 0 : index
    %c0_80 = arith.constant 0 : index
    %99 = vector.load %arg1[%98, %c0_79, %c0_80] : memref<8x8x128xf32, #tpu.memory_space<vmem>>, vector<1x8x128xf32>
    %100 = vector.shape_cast %99 : vector<1x8x128xf32> to vector<8x128xf32>
    %c0_81 = arith.constant 0 : index
    %c0_82 = arith.constant 0 : index
    %101 = vector.load %arg5[%c0_81, %c0_82] : memref<8x128xf32, #tpu.memory_space<vmem>>, vector<8x128xf32>
    %102 = tpu.concatenate %100, %101 in 1 : vector<8x128xf32>, vector<8x128xf32> -> vector<8x256xf32>
    %c0_83 = arith.constant 0 : index
    %c0_84 = arith.constant 0 : index
    %103 = vector.load %arg2[%c0_83, %c0_84] : memref<256x128xf32, #tpu.memory_space<vmem>>, vector<256x128xf32>
    %cst_85 = arith.constant dense<0.000000e+00> : vector<8x128xf32>
    %104 = tpu.matmul %102, %103, %cst_85 {dimension_numbers = #tpu.dot_dimension_numbers<[1], [0], [0], [1], [0, 0, 1, 1], [], []>} : vector<8x256xf32>, vector<256x128xf32>, vector<8x128xf32> -> vector<8x128xf32>
    %c0_86 = arith.constant 0 : index
    %c0_87 = arith.constant 0 : index
    %105 = vector.load %arg3[%c0_86, %c0_87] : memref<1x128xf32, #tpu.memory_space<vmem>>, vector<1x128xf32>
    %106 = vector.broadcast %105 : vector<1x128xf32> to vector<8x128xf32>
    %107 = arith.addf %104, %106 : vector<8x128xf32>
    %108 = math.tanh %107 : vector<8x128xf32>
    %c0_88 = arith.constant 0 : index
    %c0_89 = arith.constant 0 : index
    %109 = vector.load %arg5[%c0_88, %c0_89] : memref<8x128xf32, #tpu.memory_space<vmem>>, vector<8x128xf32>
    tpu.vector_store %arg5[%c0_88, %c0_89], %108 {strides = array<i32>} : memref<8x128xf32, #tpu.memory_space<vmem>>, vector<8x128xf32>,
    %110 = arith.index_cast %c6_i32 : i32 to index
    %c0_90 = arith.constant 0 : index
    %c0_91 = arith.constant 0 : index
    %111 = vector.load %arg4[%110, %c0_90, %c0_91] : memref<8x8x128xf32, #tpu.memory_space<vmem>>, vector<1x8x128xf32>
    %112 = vector.shape_cast %111 : vector<1x8x128xf32> to vector<8x128xf32>
    %113 = vector.shape_cast %108 : vector<8x128xf32> to vector<1x8x128xf32>
    tpu.vector_store %arg4[%110, %c0_90, %c0_91], %113 {strides = array<i32>} : memref<8x8x128xf32, #tpu.memory_space<vmem>>, vector<1x8x128xf32>,
    %c7_i32 = arith.constant 7 : i32
    %114 = arith.index_cast %c7_i32 : i32 to index
    %c0_92 = arith.constant 0 : index
    %c0_93 = arith.constant 0 : index
    %115 = vector.load %arg1[%114, %c0_92, %c0_93] : memref<8x8x128xf32, #tpu.memory_space<vmem>>, vector<1x8x128xf32>
    %116 = vector.shape_cast %115 : vector<1x8x128xf32> to vector<8x128xf32>
    %c0_94 = arith.constant 0 : index
    %c0_95 = arith.constant 0 : index
    %117 = vector.load %arg5[%c0_94, %c0_95] : memref<8x128xf32, #tpu.memory_space<vmem>>, vector<8x128xf32>
    %118 = tpu.concatenate %116, %117 in 1 : vector<8x128xf32>, vector<8x128xf32> -> vector<8x256xf32>
    %c0_96 = arith.constant 0 : index
    %c0_97 = arith.constant 0 : index
    %119 = vector.load %arg2[%c0_96, %c0_97] : memref<256x128xf32, #tpu.memory_space<vmem>>, vector<256x128xf32>
    %cst_98 = arith.constant dense<0.000000e+00> : vector<8x128xf32>
    %120 = tpu.matmul %118, %119, %cst_98 {dimension_numbers = #tpu.dot_dimension_numbers<[1], [0], [0], [1], [0, 0, 1, 1], [], []>} : vector<8x256xf32>, vector<256x128xf32>, vector<8x128xf32> -> vector<8x128xf32>
    %c0_99 = arith.constant 0 : index
    %c0_100 = arith.constant 0 : index
    %121 = vector.load %arg3[%c0_99, %c0_100] : memref<1x128xf32, #tpu.memory_space<vmem>>, vector<1x128xf32>
    %122 = vector.broadcast %121 : vector<1x128xf32> to vector<8x128xf32>
    %123 = arith.addf %120, %122 : vector<8x128xf32>
    %124 = math.tanh %123 : vector<8x128xf32>
    %c0_101 = arith.constant 0 : index
    %c0_102 = arith.constant 0 : index
    %125 = vector.load %arg5[%c0_101, %c0_102] : memref<8x128xf32, #tpu.memory_space<vmem>>, vector<8x128xf32>
    tpu.vector_store %arg5[%c0_101, %c0_102], %124 {strides = array<i32>} : memref<8x128xf32, #tpu.memory_space<vmem>>, vector<8x128xf32>,
    %126 = arith.index_cast %c7_i32 : i32 to index
    %c0_103 = arith.constant 0 : index
    %c0_104 = arith.constant 0 : index
    %127 = vector.load %arg4[%126, %c0_103, %c0_104] : memref<8x8x128xf32, #tpu.memory_space<vmem>>, vector<1x8x128xf32>
    %128 = vector.shape_cast %127 : vector<1x8x128xf32> to vector<8x128xf32>
    %129 = vector.shape_cast %124 : vector<8x128xf32> to vector<1x8x128xf32>
    tpu.vector_store %arg4[%126, %c0_103, %c0_104], %129 {strides = array<i32>} : memref<8x8x128xf32, #tpu.memory_space<vmem>>, vector<1x8x128xf32>,
    %c8_i32 = arith.constant 8 : i32
    return
  }
  func.func @transform_0(%arg0: i32) -> (i32, i32, i32) {
    %c0_i32 = arith.constant 0 : i32
    %c0_i32_0 = arith.constant 0 : i32
    %c0_i32_1 = arith.constant 0 : i32
    return %c0_i32, %arg0, %c0_i32_0 : i32, i32, i32
  }
  func.func @transform_1(%arg0: i32) -> (i32, i32) {
    %c0_i32 = arith.constant 0 : i32
    %c0_i32_0 = arith.constant 0 : i32
    %c0_i32_1 = arith.constant 0 : i32
    return %c0_i32, %c0_i32_0 : i32, i32
  }
  func.func @transform_2(%arg0: i32) -> (i32, i32) {
    %c0_i32 = arith.constant 0 : i32
    %c0_i32_0 = arith.constant 0 : i32
    %c0_i32_1 = arith.constant 0 : i32
    return %c0_i32, %c0_i32_0 : i32, i32
  }
  func.func @transform_3(%arg0: i32) -> (i32, i32, i32) {
    %c0_i32 = arith.constant 0 : i32
    %c0_i32_0 = arith.constant 0 : i32
    %c0_i32_1 = arith.constant 0 : i32
    return %c0_i32, %arg0, %c0_i32_0 : i32, i32, i32
  }
}

</mosaic_0001>

<llo_original>
// kernel: tpu_custom_call.1
$region0: #{tpu_custom_call.1}
  #allocation0 [shape = 'u32[]', space=smem, size = 0x4, offset = 0x4, fixed_abs, tag = 'smem constant byte address 0x4 - core index']
  #allocation1 [shape = 'u32[144,128]{1,0:T(1,128)}', space=vmem, size = 0x12000, scoped, tag = 'internal scratch']
  #allocation2 [shape = 'f32[8,128]{1,0:T(8,128)}', space=vmem, size = 0x1000, scoped, tag = 'scratch operand']
  %s0 = inlined_call_operand.hbm [shape: f32[8,8,128], index: 0, kind: input, shape index: {}]
  %s1 = inlined_call_operand.hbm [shape: f32[256,128], index: 1, kind: input, shape index: {}]
  %s2 = inlined_call_operand.vmem [shape: f32[1,128], index: 2, kind: input, shape index: {}]
  %s3 = inlined_call_operand.hbm [shape: f32[8,8,128], index: 3, kind: output, shape index: {}]
  %s4 = sld [smem:[#allocation0]]
  $region30: #{tpu_custom_call.1} parent=0
    _
  %s6 = ssub.s32 1, %s4
  %s7 = scalar_select 0, %s6, %s4
  $region1: #{tpu_custom_call.1} parent=0
    #allocation3 [shape = 'u8[32768]{0}', space=vmem, size = 0x8000, scoped, tag = 'input window, operand 0, single buffered']
    #allocation4 [shape = 's32[1]{0}', space=sflag, size = 0x4, scoped, tag = 'scoped memory for tpu_custom_call.1']
    #allocation5 [shape = 's32[1]{0}', space=sflag, size = 0x4, scoped, tag = 'scoped memory for tpu_custom_call.1']
    #allocation6 [shape = 'u8[131072]{0}', space=vmem, size = 0x20000, scoped, tag = 'input window, operand 1, single buffered']
    #allocation7 [shape = 's32[1]{0}', space=sflag, size = 0x4, scoped, tag = 'scoped memory for tpu_custom_call.1']
    #allocation8 [shape = 'u8[32768]{0}', space=vmem, size = 0x8000, scoped, tag = 'output window, operand 0, single buffered']
    %8 = vsyncpa [#allocation4], 0
    %9 = vsyncpa [#allocation7], 0
    %10 = vsyncpa [#allocation5], 0
    // Predicated region
    $region2: #{tpu_custom_call.1} parent=1 // pred_check
      _
    $region3: #{tpu_custom_call.1} parent=1 // pred_check_branch
      %12 = sbr.rel (0) target = $region5
    $region4: #{tpu_custom_call.1} parent=1 // pred_region
      %s14 = ssub.s32 1024, 1024
      %15 = vsyncadd [#allocation4], %s14
      %s16 = sshll.u32 [#allocation3], 4
      %s17 = int_to_ptr.vmem [resolvable:$true] %s16
      %22 = dma.hbm_to_vmem [thread:$0]  %s0, 1024, %s17, [#allocation4], 128, 128, 8
    $region5: #{tpu_custom_call.1} parent=1 // pred_fallthru
      _
    // Predicated region
    $region6: #{tpu_custom_call.1} parent=1 // pred_check
      _
    $region7: #{tpu_custom_call.1} parent=1 // pred_check_branch
      %24 = sbr.rel (0) target = $region9
    $region8: #{tpu_custom_call.1} parent=1 // pred_region
      %s26 = ssub.s32 4096, 4096
      %27 = vsyncadd [#allocation7], %s26
      %s28 = sshll.u32 [#allocation6], 4
      %s29 = int_to_ptr.vmem [resolvable:$true] %s28
      %34 = dma.hbm_to_vmem [thread:$0]  %s1, 4096, %s29, [#allocation7], 128, 128, 8
    $region9: #{tpu_custom_call.1} parent=1 // pred_fallthru
      _
    // Predicated region
    $region10: #{tpu_custom_call.1} parent=1 // pred_check
      _
    $region11: #{tpu_custom_call.1} parent=1 // pred_check_branch
      %36 = sbr.rel (0) target = $region13
    $region12: #{tpu_custom_call.1} parent=1 // pred_region
      _
    $region13: #{tpu_custom_call.1} parent=1 // pred_fallthru
      _
    // Predicated region
    $region14: #{tpu_custom_call.1} parent=1 // pred_check
      _
    $region15: #{tpu_custom_call.1} parent=1 // pred_check_branch
      %38 = sbr.rel (0) target = $region17
    $region16: #{tpu_custom_call.1} parent=1 // pred_region
      %39 = dma.done [#allocation4], 1024
    $region17: #{tpu_custom_call.1} parent=1 // pred_fallthru
      _
    // Predicated region
    $region18: #{tpu_custom_call.1} parent=1 // pred_check
      _
    $region19: #{tpu_custom_call.1} parent=1 // pred_check_branch
      %41 = sbr.rel (0) target = $region21
    $region20: #{tpu_custom_call.1} parent=1 // pred_region
      %42 = dma.done [#allocation7], 4096
    $region21: #{tpu_custom_call.1} parent=1 // pred_fallthru
      _
    %43 = vst [vmem:[#allocation2] sm:$0xff] 0.0
    %v44 = vld [vmem:[#allocation3] sm:$0xff]
    %v45 = vld [vmem:[#allocation2] sm:$0xff]
    %v46 = vld [vmem:[#allocation6] sm:$0xff]
    %v47 = vld [vmem:[#allocation6 + $0x8] sm:$0xff]
    %v48 = vld [vmem:[#allocation6 + $0x10] sm:$0xff]
    %v49 = vld [vmem:[#allocation6 + $0x18] sm:$0xff]
    %v50 = vld [vmem:[#allocation6 + $0x20] sm:$0xff]
    %v51 = vld [vmem:[#allocation6 + $0x28] sm:$0xff]
    %v52 = vld [vmem:[#allocation6 + $0x30] sm:$0xff]
    %v53 = vld [vmem:[#allocation6 + $0x38] sm:$0xff]
    %v54 = vld [vmem:[#allocation6 + $0x40] sm:$0xff]
    %v55 = vld [vmem:[#allocation6 + $0x48] sm:$0xff]
    %v56 = vld [vmem:[#allocation6 + $0x50] sm:$0xff]
    %v57 = vld [vmem:[#allocation6 + $0x58] sm:$0xff]
    %v58 = vld [vmem:[#allocation6 + $0x60] sm:$0xff]
    %v59 = vld [vmem:[#allocation6 + $0x68] sm:$0xff]
    %v60 = vld [vmem:[#allocation6 + $0x70] sm:$0xff]
    %v61 = vld [vmem:[#allocation6 + $0x78] sm:$0xff]
    %v62 = vld [vmem:[#allocation6 + $0x80] sm:$0xff]
    %v63 = vld [vmem:[#allocation6 + $0x88] sm:$0xff]
    %v64 = vld [vmem:[#allocation6 + $0x90] sm:$0xff]
    %v65 = vld [vmem:[#allocation6 + $0x98] sm:$0xff]
    %v66 = vld [vmem:[#allocation6 + $0xa0] sm:$0xff]
    %v67 = vld [vmem:[#allocation6 + $0xa8] sm:$0xff]
    %v68 = vld [vmem:[#allocation6 + $0xb0] sm:$0xff]
    %v69 = vld [vmem:[#allocation6 + $0xb8] sm:$0xff]
    %v70 = vld [vmem:[#allocation6 + $0xc0] sm:$0xff]
    %v71 = vld [vmem:[#allocation6 + $0xc8] sm:$0xff]
    %v72 = vld [vmem:[#allocation6 + $0xd0] sm:$0xff]
    %v73 = vld [vmem:[#allocation6 + $0xd8] sm:$0xff]
    %v74 = vld [vmem:[#allocation6 + $0xe0] sm:$0xff]
    %v75 = vld [vmem:[#allocation6 + $0xe8] sm:$0xff]
    %v76 = vld [vmem:[#allocation6 + $0xf0] sm:$0xff]
    %v77 = vld [vmem:[#allocation6 + $0xf8] sm:$0xff]
    %v78 = vld [vmem:[%s2] sm:$0x1]
    %v80 = vlaneseq
    %v81 = vshrl.u32 %v80, 7
    %v82 = vsub.s32 0, %v81
    %v83 = vrot.slane %v78, %v82
    %85 = vmatprep.subr.mxu0 0.0
    %86 = vmatpush1.msra.mxu0 %v46
    %87 = vmatprep.subr.mxu0 0.0
    %88 = vmatpush1.msra.mxu0 %v47
    %89 = vmatprep.subr.mxu0 0.0
    %90 = vmatpush1.msra.mxu0 %v48
    %91 = vmatprep.subr.mxu0 0.0
    %92 = vmatpush1.msra.mxu0 %v49
    %93 = vmatprep.subr.mxu0 0.0
    %94 = vmatpush1.msra.mxu0 %v50
    %95 = vmatprep.subr.mxu0 0.0
    %96 = vmatpush1.msra.mxu0 %v51
    %97 = vmatprep.subr.mxu0 0.0
    %98 = vmatpush1.msra.mxu0 %v52
    %99 = vmatprep.subr.mxu0 0.0
    %100 = vmatpush1.msra.mxu0 %v53
    %101 = vmatprep.subr.mxu0 0.0
    %102 = vmatpush1.msra.mxu0 %v54
    %103 = vmatprep.subr.mxu0 0.0
    %104 = vmatpush1.msra.mxu0 %v55
    %105 = vmatprep.subr.mxu0 0.0
    %106 = vmatpush1.msra.mxu0 %v56
    %107 = vmatprep.subr.mxu0 0.0
    %108 = vmatpush1.msra.mxu0 %v57
    %109 = vmatprep.subr.mxu0 0.0
    %110 = vmatpush1.msra.mxu0 %v58
    %111 = vmatprep.subr.mxu0 0.0
    %112 = vmatpush1.msra.mxu0 %v59
    %113 = vmatprep.subr.mxu0 0.0
    %114 = vmatpush1.msra.mxu0 %v60
    %115 = vmatprep.subr.mxu0 0.0
    %116 = vmatpush1.msra.mxu0 %v61
    %117 = vmatprep.subr.mxu0 0.0
    %118 = vmatpush1.msra.mxu0 %v62
    %119 = vmatprep.subr.mxu0 0.0
    %120 = vmatpush1.msra.mxu0 %v63
    %121 = vmatprep.subr.mxu0 0.0
    %122 = vmatpush1.msra.mxu0 %v64
    %123 = vmatprep.subr.mxu0 0.0
    %124 = vmatpush1.msra.mxu0 %v65
    %125 = vmatprep.subr.mxu0 0.0
    %126 = vmatpush1.msra.mxu0 %v66
    %127 = vmatprep.subr.mxu0 0.0
    %128 = vmatpush1.msra.mxu0 %v67
    %129 = vmatprep.subr.mxu0 0.0
    %130 = vmatpush1.msra.mxu0 %v68
    %131 = vmatprep.subr.mxu0 0.0
    %132 = vmatpush1.msra.mxu0 %v69
    %133 = vmatprep.subr.mxu0 0.0
    %134 = vmatpush1.msra.mxu0 %v70
    %135 = vmatprep.subr.mxu0 0.0
    %136 = vmatpush1.msra.mxu0 %v71
    %137 = vmatprep.subr.mxu0 0.0
    %138 = vmatpush1.msra.mxu0 %v72
    %139 = vmatprep.subr.mxu0 0.0
    %140 = vmatpush1.msra.mxu0 %v73
    %141 = vmatprep.subr.mxu0 0.0
    %142 = vmatpush1.msra.mxu0 %v74
    %143 = vmatprep.subr.mxu0 0.0
    %144 = vmatpush1.msra.mxu0 %v75
    %145 = vmatprep.subr.mxu0 0.0
    %146 = vmatpush1.msra.mxu0 %v76
    %147 = vmatprep.subr.mxu0 0.0
    %148 = vmatpush1.msra.mxu0 %v77
    %149 = vmatprep.mubr.f32.mxu0 %v45
    %150 = vmatmul.mubr.f32.gmra.mrb[0].mxu0 %v44
    %v151 = vpop.f32.mrb[0].mxu0
    %v152 = vadd.f32 %v83, %v151
    %v153 = vpop.f32.mrb[0].mxu0
    %154 = vdwg.mxu0
    %v155 = vtanh.pop %v152
    %156 = vst [vmem:[#allocation2] sm:$0xff] %v155
    %157 = vst [vmem:[#allocation8] sm:$0xff] %v155
    %s158 = scalar_lea.vmem [#allocation3], 8
    %v159 = vld [vmem:[%s158] sm:$0xff]
    %v160 = vld [vmem:[#allocation2] sm:$0xff]
    %v161 = vld [vmem:[#allocation6] sm:$0xff]
    %v162 = vld [vmem:[#allocation6 + $0x8] sm:$0xff]
    %v163 = vld [vmem:[#allocation6 + $0x10] sm:$0xff]
    %v164 = vld [vmem:[#allocation6 + $0x18] sm:$0xff]
    %v165 = vld [vmem:[#allocation6 + $0x20] sm:$0xff]
    %v166 = vld [vmem:[#allocation6 + $0x28] sm:$0xff]
    %v167 = vld [vmem:[#allocation6 + $0x30] sm:$0xff]
    %v168 = vld [vmem:[#allocation6 + $0x38] sm:$0xff]
    %v169 = vld [vmem:[#allocation6 + $0x40] sm:$0xff]
    %v170 = vld [vmem:[#allocation6 + $0x48] sm:$0xff]
    %v171 = vld [vmem:[#allocation6 + $0x50] sm:$0xff]
    %v172 = vld [vmem:[#allocation6 + $0x58] sm:$0xff]
    %v173 = vld [vmem:[#allocation6 + $0x60] sm:$0xff]
    %v174 = vld [vmem:[#allocation6 + $0x68] sm:$0xff]
    %v175 = vld [vmem:[#allocation6 + $0x70] sm:$0xff]
    %v176 = vld [vmem:[#allocation6 + $0x78] sm:$0xff]
    %v177 = vld [vmem:[#allocation6 + $0x80] sm:$0xff]
    %v178 = vld [vmem:[#allocation6 + $0x88] sm:$0xff]
    %v179 = vld [vmem:[#allocation6 + $0x90] sm:$0xff]
    %v180 = vld [vmem:[#allocation6 + $0x98] sm:$0xff]
    %v181 = vld [vmem:[#allocation6 + $0xa0] sm:$0xff]
    %v182 = vld [vmem:[#allocation6 + $0xa8] sm:$0xff]
    %v183 = vld [vmem:[#allocation6 + $0xb0] sm:$0xff]
    %v184 = vld [vmem:[#allocation6 + $0xb8] sm:$0xff]
    %v185 = vld [vmem:[#allocation6 + $0xc0] sm:$0xff]
    %v186 = vld [vmem:[#allocation6 + $0xc8] sm:$0xff]
    %v187 = vld [vmem:[#allocation6 + $0xd0] sm:$0xff]
    %v188 = vld [vmem:[#allocation6 + $0xd8] sm:$0xff]
    %v189 = vld [vmem:[#allocation6 + $0xe0] sm:$0xff]
    %v190 = vld [vmem:[#allocation6 + $0xe8] sm:$0xff]
    %v191 = vld [vmem:[#allocation6 + $0xf0] sm:$0xff]
    %v192 = vld [vmem:[#allocation6 + $0xf8] sm:$0xff]
    %v193 = vld [vmem:[%s2] sm:$0x1]
    %v195 = vlaneseq
    %v196 = vshrl.u32 %v195, 7
    %v197 = vsub.s32 0, %v196
    %v198 = vrot.slane %v193, %v197
    %200 = vmatprep.subr.mxu0 0.0
    %201 = vmatpush1.msra.mxu0 %v161
    %202 = vmatprep.subr.mxu0 0.0
    %203 = vmatpush1.msra.mxu0 %v162
    %204 = vmatprep.subr.mxu0 0.0
    %205 = vmatpush1.msra.mxu0 %v163
    %206 = vmatprep.subr.mxu0 0.0
    %207 = vmatpush1.msra.mxu0 %v164
    %208 = vmatprep.subr.mxu0 0.0
    %209 = vmatpush1.msra.mxu0 %v165
    %210 = vmatprep.subr.mxu0 0.0
    %211 = vmatpush1.msra.mxu0 %v166
    %212 = vmatprep.subr.mxu0 0.0
    %213 = vmatpush1.msra.mxu0 %v167
    %214 = vmatprep.subr.mxu0 0.0
    %215 = vmatpush1.msra.mxu0 %v168
    %216 = vmatprep.subr.mxu0 0.0
    %217 = vmatpush1.msra.mxu0 %v169
    %218 = vmatprep.subr.mxu0 0.0
    %219 = vmatpush1.msra.mxu0 %v170
    %220 = vmatprep.subr.mxu0 0.0
    %221 = vmatpush1.msra.mxu0 %v171
    %222 = vmatprep.subr.mxu0 0.0
    %223 = vmatpush1.msra.mxu0 %v172
    %224 = vmatprep.subr.mxu0 0.0
    %225 = vmatpush1.msra.mxu0 %v173
    %226 = vmatprep.subr.mxu0 0.0
    %227 = vmatpush1.msra.mxu0 %v174
    %228 = vmatprep.subr.mxu0 0.0
    %229 = vmatpush1.msra.mxu0 %v175
    %230 = vmatprep.subr.mxu0 0.0
    %231 = vmatpush1.msra.mxu0 %v176
    %232 = vmatprep.subr.mxu0 0.0
    %233 = vmatpush1.msra.mxu0 %v177
    %234 = vmatprep.subr.mxu0 0.0
    %235 = vmatpush1.msra.mxu0 %v178
    %236 = vmatprep.subr.mxu0 0.0
    %237 = vmatpush1.msra.mxu0 %v179
    %238 = vmatprep.subr.mxu0 0.0
    %239 = vmatpush1.msra.mxu0 %v180
    %240 = vmatprep.subr.mxu0 0.0
    %241 = vmatpush1.msra.mxu0 %v181
    %242 = vmatprep.subr.mxu0 0.0
    %243 = vmatpush1.msra.mxu0 %v182
    %244 = vmatprep.subr.mxu0 0.0
    %245 = vmatpush1.msra.mxu0 %v183
    %246 = vmatprep.subr.mxu0 0.0
    %247 = vmatpush1.msra.mxu0 %v184
    %248 = vmatprep.subr.mxu0 0.0
    %249 = vmatpush1.msra.mxu0 %v185
    %250 = vmatprep.subr.mxu0 0.0
    %251 = vmatpush1.msra.mxu0 %v186
    %252 = vmatprep.subr.mxu0 0.0
    %253 = vmatpush1.msra.mxu0 %v187
    %254 = vmatprep.subr.mxu0 0.0
    %255 = vmatpush1.msra.mxu0 %v188
    %256 = vmatprep.subr.mxu0 0.0
    %257 = vmatpush1.msra.mxu0 %v189
    %258 = vmatprep.subr.mxu0 0.0
    %259 = vmatpush1.msra.mxu0 %v190
    %260 = vmatprep.subr.mxu0 0.0
    %261 = vmatpush1.msra.mxu0 %v191
    %262 = vmatprep.subr.mxu0 0.0
    %263 = vmatpush1.msra.mxu0 %v192
    %264 = vmatprep.mubr.f32.mxu0 %v160
    %265 = vmatmul.mubr.f32.gmra.mrb[0].mxu0 %v159
    %v266 = vpop.f32.mrb[0].mxu0
    %v267 = vadd.f32 %v198, %v266
    %v268 = vpop.f32.mrb[0].mxu0
    %269 = vdwg.mxu0
    %v270 = vtanh.pop %v267
    %271 = vst [vmem:[#allocation2] sm:$0xff] %v270
    %s272 = scalar_lea.vmem [#allocation8], 8
    %273 = vst [vmem:[%s272] sm:$0xff] %v270
    %s274 = scalar_lea.vmem [#allocation3], 16
    %v275 = vld [vmem:[%s274] sm:$0xff]
    %v276 = vld [vmem:[#allocation2] sm:$0xff]
    %v277 = vld [vmem:[#allocation6] sm:$0xff]
    %v278 = vld [vmem:[#allocation6 + $0x8] sm:$0xff]
    %v279 = vld [vmem:[#allocation6 + $0x10] sm:$0xff]
    %v280 = vld [vmem:[#allocation6 + $0x18] sm:$0xff]
    %v281 = vld [vmem:[#allocation6 + $0x20] sm:$0xff]
    %v282 = vld [vmem:[#allocation6 + $0x28] sm:$0xff]
    %v283 = vld [vmem:[#allocation6 + $0x30] sm:$0xff]
    %v284 = vld [vmem:[#allocation6 + $0x38] sm:$0xff]
    %v285 = vld [vmem:[#allocation6 + $0x40] sm:$0xff]
    %v286 = vld [vmem:[#allocation6 + $0x48] sm:$0xff]
    %v287 = vld [vmem:[#allocation6 + $0x50] sm:$0xff]
    %v288 = vld [vmem:[#allocation6 + $0x58] sm:$0xff]
    %v289 = vld [vmem:[#allocation6 + $0x60] sm:$0xff]
    %v290 = vld [vmem:[#allocation6 + $0x68] sm:$0xff]
    %v291 = vld [vmem:[#allocation6 + $0x70] sm:$0xff]
    %v292 = vld [vmem:[#allocation6 + $0x78] sm:$0xff]
    %v293 = vld [vmem:[#allocation6 + $0x80] sm:$0xff]
    %v294 = vld [vmem:[#allocation6 + $0x88] sm:$0xff]
    %v295 = vld [vmem:[#allocation6 + $0x90] sm:$0xff]
    %v296 = vld [vmem:[#allocation6 + $0x98] sm:$0xff]
    %v297 = vld [vmem:[#allocation6 + $0xa0] sm:$0xff]
    %v298 = vld [vmem:[#allocation6 + $0xa8] sm:$0xff]
    %v299 = vld [vmem:[#allocation6 + $0xb0] sm:$0xff]
    %v300 = vld [vmem:[#allocation6 + $0xb8] sm:$0xff]
    %v301 = vld [vmem:[#allocation6 + $0xc0] sm:$0xff]
    %v302 = vld [vmem:[#allocation6 + $0xc8] sm:$0xff]
    %v303 = vld [vmem:[#allocation6 + $0xd0] sm:$0xff]
    %v304 = vld [vmem:[#allocation6 + $0xd8] sm:$0xff]
    %v305 = vld [vmem:[#allocation6 + $0xe0] sm:$0xff]
    %v306 = vld [vmem:[#allocation6 + $0xe8] sm:$0xff]
    %v307 = vld [vmem:[#allocation6 + $0xf0] sm:$0xff]
    %v308 = vld [vmem:[#allocation6 + $0xf8] sm:$0xff]
    %v309 = vld [vmem:[%s2] sm:$0x1]
    %v311 = vlaneseq
    %v312 = vshrl.u32 %v311, 7
    %v313 = vsub.s32 0, %v312
    %v314 = vrot.slane %v309, %v313
    %316 = vmatprep.subr.mxu0 0.0
    %317 = vmatpush1.msra.mxu0 %v277
    %318 = vmatprep.subr.mxu0 0.0
    %319 = vmatpush1.msra.mxu0 %v278
    %320 = vmatprep.subr.mxu0 0.0
    %321 = vmatpush1.msra.mxu0 %v279
    %322 = vmatprep.subr.mxu0 0.0
    %323 = vmatpush1.msra.mxu0 %v280
    %324 = vmatprep.subr.mxu0 0.0
    %325 = vmatpush1.msra.mxu0 %v281
    %326 = vmatprep.subr.mxu0 0.0
    %327 = vmatpush1.msra.mxu0 %v282
    %328 = vmatprep.subr.mxu0 0.0
    %329 = vmatpush1.msra.mxu0 %v283
    %330 = vmatprep.subr.mxu0 0.0
    %331 = vmatpush1.msra.mxu0 %v284
    %332 = vmatprep.subr.mxu0 0.0
    %333 = vmatpush1.msra.mxu0 %v285
    %334 = vmatprep.subr.mxu0 0.0
    %335 = vmatpush1.msra.mxu0 %v286
    %336 = vmatprep.subr.mxu0 0.0
    %337 = vmatpush1.msra.mxu0 %v287
    %338 = vmatprep.subr.mxu0 0.0
    %339 = vmatpush1.msra.mxu0 %v288
    %340 = vmatprep.subr.mxu0 0.0
    %341 = vmatpush1.msra.mxu0 %v289
    %342 = vmatprep.subr.mxu0 0.0
    %343 = vmatpush1.msra.mxu0 %v290
    %344 = vmatprep.subr.mxu0 0.0
    %345 = vmatpush1.msra.mxu0 %v291
    %346 = vmatprep.subr.mxu0 0.0
    %347 = vmatpush1.msra.mxu0 %v292
    %348 = vmatprep.subr.mxu0 0.0
    %349 = vmatpush1.msra.mxu0 %v293
    %350 = vmatprep.subr.mxu0 0.0
    %351 = vmatpush1.msra.mxu0 %v294
    %352 = vmatprep.subr.mxu0 0.0
    %353 = vmatpush1.msra.mxu0 %v295
    %354 = vmatprep.subr.mxu0 0.0
    %355 = vmatpush1.msra.mxu0 %v296
    %356 = vmatprep.subr.mxu0 0.0
    %357 = vmatpush1.msra.mxu0 %v297
    %358 = vmatprep.subr.mxu0 0.0
    %359 = vmatpush1.msra.mxu0 %v298
    %360 = vmatprep.subr.mxu0 0.0
    %361 = vmatpush1.msra.mxu0 %v299
    %362 = vmatprep.subr.mxu0 0.0
    %363 = vmatpush1.msra.mxu0 %v300
    %364 = vmatprep.subr.mxu0 0.0
    %365 = vmatpush1.msra.mxu0 %v301
    %366 = vmatprep.subr.mxu0 0.0
    %367 = vmatpush1.msra.mxu0 %v302
    %368 = vmatprep.subr.mxu0 0.0
    %369 = vmatpush1.msra.mxu0 %v303
    %370 = vmatprep.subr.mxu0 0.0
    %371 = vmatpush1.msra.mxu0 %v304
    %372 = vmatprep.subr.mxu0 0.0
    %373 = vmatpush1.msra.mxu0 %v305
    %374 = vmatprep.subr.mxu0 0.0
    %375 = vmatpush1.msra.mxu0 %v306
    %376 = vmatprep.subr.mxu0 0.0
    %377 = vmatpush1.msra.mxu0 %v307
    %378 = vmatprep.subr.mxu0 0.0
    %379 = vmatpush1.msra.mxu0 %v308
    %380 = vmatprep.mubr.f32.mxu0 %v276
    %381 = vmatmul.mubr.f32.gmra.mrb[0].mxu0 %v275
    %v382 = vpop.f32.mrb[0].mxu0
    %v383 = vadd.f32 %v314, %v382
    %v384 = vpop.f32.mrb[0].mxu0
    %385 = vdwg.mxu0
    %v386 = vtanh.pop %v383
    %387 = vst [vmem:[#allocation2] sm:$0xff] %v386
    %s388 = scalar_lea.vmem [#allocation8], 16
    %389 = vst [vmem:[%s388] sm:$0xff] %v386
    %s390 = scalar_lea.vmem [#allocation3], 24
    %v391 = vld [vmem:[%s390] sm:$0xff]
    %v392 = vld [vmem:[#allocation2] sm:$0xff]
    %v393 = vld [vmem:[#allocation6] sm:$0xff]
    %v394 = vld [vmem:[#allocation6 + $0x8] sm:$0xff]
    %v395 = vld [vmem:[#allocation6 + $0x10] sm:$0xff]
    %v396 = vld [vmem:[#allocation6 + $0x18] sm:$0xff]
    %v397 = vld [vmem:[#allocation6 + $0x20] sm:$0xff]
    %v398 = vld [vmem:[#allocation6 + $0x28] sm:$0xff]
    %v399 = vld [vmem:[#allocation6 + $0x30] sm:$0xff]
    %v400 = vld [vmem:[#allocation6 + $0x38] sm:$0xff]
    %v401 = vld [vmem:[#allocation6 + $0x40] sm:$0xff]
    %v402 = vld [vmem:[#allocation6 + $0x48] sm:$0xff]
    %v403 = vld [vmem:[#allocation6 + $0x50] sm:$0xff]
    %v404 = vld [vmem:[#allocation6 + $0x58] sm:$0xff]
    %v405 = vld [vmem:[#allocation6 + $0x60] sm:$0xff]
    %v406 = vld [vmem:[#allocation6 + $0x68] sm:$0xff]
    %v407 = vld [vmem:[#allocation6 + $0x70] sm:$0xff]
    %v408 = vld [vmem:[#allocation6 + $0x78] sm:$0xff]
    %v409 = vld [vmem:[#allocation6 + $0x80] sm:$0xff]
    %v410 = vld [vmem:[#allocation6 + $0x88] sm:$0xff]
    %v411 = vld [vmem:[#allocation6 + $0x90] sm:$0xff]
    %v412 = vld [vmem:[#allocation6 + $0x98] sm:$0xff]
    %v413 = vld [vmem:[#allocation6 + $0xa0] sm:$0xff]
    %v414 = vld [vmem:[#allocation6 + $0xa8] sm:$0xff]
    %v415 = vld [vmem:[#allocation6 + $0xb0] sm:$0xff]
    %v416 = vld [vmem:[#allocation6 + $0xb8] sm:$0xff]
    %v417 = vld [vmem:[#allocation6 + $0xc0] sm:$0xff]
    %v418 = vld [vmem:[#allocation6 + $0xc8] sm:$0xff]
    %v419 = vld [vmem:[#allocation6 + $0xd0] sm:$0xff]
    %v420 = vld [vmem:[#allocation6 + $0xd8] sm:$0xff]
    %v421 = vld [vmem:[#allocation6 + $0xe0] sm:$0xff]
    %v422 = vld [vmem:[#allocation6 + $0xe8] sm:$0xff]
    %v423 = vld [vmem:[#allocation6 + $0xf0] sm:$0xff]
    %v424 = vld [vmem:[#allocation6 + $0xf8] sm:$0xff]
    %v425 = vld [vmem:[%s2] sm:$0x1]
    %v427 = vlaneseq
    %v428 = vshrl.u32 %v427, 7
    %v429 = vsub.s32 0, %v428
    %v430 = vrot.slane %v425, %v429
    %432 = vmatprep.subr.mxu0 0.0
    %433 = vmatpush1.msra.mxu0 %v393
    %434 = vmatprep.subr.mxu0 0.0
    %435 = vmatpush1.msra.mxu0 %v394
    %436 = vmatprep.subr.mxu0 0.0
    %437 = vmatpush1.msra.mxu0 %v395
    %438 = vmatprep.subr.mxu0 0.0
    %439 = vmatpush1.msra.mxu0 %v396
    %440 = vmatprep.subr.mxu0 0.0
    %441 = vmatpush1.msra.mxu0 %v397
    %442 = vmatprep.subr.mxu0 0.0
    %443 = vmatpush1.msra.mxu0 %v398
    %444 = vmatprep.subr.mxu0 0.0
    %445 = vmatpush1.msra.mxu0 %v399
    %446 = vmatprep.subr.mxu0 0.0
    %447 = vmatpush1.msra.mxu0 %v400
    %448 = vmatprep.subr.mxu0 0.0
    %449 = vmatpush1.msra.mxu0 %v401
    %450 = vmatprep.subr.mxu0 0.0
    %451 = vmatpush1.msra.mxu0 %v402
    %452 = vmatprep.subr.mxu0 0.0
    %453 = vmatpush1.msra.mxu0 %v403
    %454 = vmatprep.subr.mxu0 0.0
    %455 = vmatpush1.msra.mxu0 %v404
    %456 = vmatprep.subr.mxu0 0.0
    %457 = vmatpush1.msra.mxu0 %v405
    %458 = vmatprep.subr.mxu0 0.0
    %459 = vmatpush1.msra.mxu0 %v406
    %460 = vmatprep.subr.mxu0 0.0
    %461 = vmatpush1.msra.mxu0 %v407
    %462 = vmatprep.subr.mxu0 0.0
    %463 = vmatpush1.msra.mxu0 %v408
    %464 = vmatprep.subr.mxu0 0.0
    %465 = vmatpush1.msra.mxu0 %v409
    %466 = vmatprep.subr.mxu0 0.0
    %467 = vmatpush1.msra.mxu0 %v410
    %468 = vmatprep.subr.mxu0 0.0
    %469 = vmatpush1.msra.mxu0 %v411
    %470 = vmatprep.subr.mxu0 0.0
    %471 = vmatpush1.msra.mxu0 %v412
    %472 = vmatprep.subr.mxu0 0.0
    %473 = vmatpush1.msra.mxu0 %v413
    %474 = vmatprep.subr.mxu0 0.0
    %475 = vmatpush1.msra.mxu0 %v414
    %476 = vmatprep.subr.mxu0 0.0
    %477 = vmatpush1.msra.mxu0 %v415
    %478 = vmatprep.subr.mxu0 0.0
    %479 = vmatpush1.msra.mxu0 %v416
    %480 = vmatprep.subr.mxu0 0.0
    %481 = vmatpush1.msra.mxu0 %v417
    %482 = vmatprep.subr.mxu0 0.0
    %483 = vmatpush1.msra.mxu0 %v418
    %484 = vmatprep.subr.mxu0 0.0
    %485 = vmatpush1.msra.mxu0 %v419
    %486 = vmatprep.subr.mxu0 0.0
    %487 = vmatpush1.msra.mxu0 %v420
    %488 = vmatprep.subr.mxu0 0.0
    %489 = vmatpush1.msra.mxu0 %v421
    %490 = vmatprep.subr.mxu0 0.0
    %491 = vmatpush1.msra.mxu0 %v422
    %492 = vmatprep.subr.mxu0 0.0
    %493 = vmatpush1.msra.mxu0 %v423
    %494 = vmatprep.subr.mxu0 0.0
    %495 = vmatpush1.msra.mxu0 %v424
    %496 = vmatprep.mubr.f32.mxu0 %v392
    %497 = vmatmul.mubr.f32.gmra.mrb[0].mxu0 %v391
    %v498 = vpop.f32.mrb[0].mxu0
    %v499 = vadd.f32 %v430, %v498
    %v500 = vpop.f32.mrb[0].mxu0
    %501 = vdwg.mxu0
    %v502 = vtanh.pop %v499
    %503 = vst [vmem:[#allocation2] sm:$0xff] %v502
    %s504 = scalar_lea.vmem [#allocation8], 24
    %505 = vst [vmem:[%s504] sm:$0xff] %v502
    %s506 = scalar_lea.vmem [#allocation3], 32
    %v507 = vld [vmem:[%s506] sm:$0xff]
    %v508 = vld [vmem:[#allocation2] sm:$0xff]
    %v509 = vld [vmem:[#allocation6] sm:$0xff]
    %v510 = vld [vmem:[#allocation6 + $0x8] sm:$0xff]
    %v511 = vld [vmem:[#allocation6 + $0x10] sm:$0xff]
    %v512 = vld [vmem:[#allocation6 + $0x18] sm:$0xff]
    %v513 = vld [vmem:[#allocation6 + $0x20] sm:$0xff]
    %v514 = vld [vmem:[#allocation6 + $0x28] sm:$0xff]
    %v515 = vld [vmem:[#allocation6 + $0x30] sm:$0xff]
    %v516 = vld [vmem:[#allocation6 + $0x38] sm:$0xff]
    %v517 = vld [vmem:[#allocation6 + $0x40] sm:$0xff]
    %v518 = vld [vmem:[#allocation6 + $0x48] sm:$0xff]
    %v519 = vld [vmem:[#allocation6 + $0x50] sm:$0xff]
    %v520 = vld [vmem:[#allocation6 + $0x58] sm:$0xff]
    %v521 = vld [vmem:[#allocation6 + $0x60] sm:$0xff]
    %v522 = vld [vmem:[#allocation6 + $0x68] sm:$0xff]
    %v523 = vld [vmem:[#allocation6 + $0x70] sm:$0xff]
    %v524 = vld [vmem:[#allocation6 + $0x78] sm:$0xff]
    %v525 = vld [vmem:[#allocation6 + $0x80] sm:$0xff]
    %v526 = vld [vmem:[#allocation6 + $0x88] sm:$0xff]
    %v527 = vld [vmem:[#allocation6 + $0x90] sm:$0xff]
    %v528 = vld [vmem:[#allocation6 + $0x98] sm:$0xff]
    %v529 = vld [vmem:[#allocation6 + $0xa0] sm:$0xff]
    %v530 = vld [vmem:[#allocation6 + $0xa8] sm:$0xff]
    %v531 = vld [vmem:[#allocation6 + $0xb0] sm:$0xff]
    %v532 = vld [vmem:[#allocation6 + $0xb8] sm:$0xff]
    %v533 = vld [vmem:[#allocation6 + $0xc0] sm:$0xff]
    %v534 = vld [vmem:[#allocation6 + $0xc8] sm:$0xff]
    %v535 = vld [vmem:[#allocation6 + $0xd0] sm:$0xff]
    %v536 = vld [vmem:[#allocation6 + $0xd8] sm:$0xff]
    %v537 = vld [vmem:[#allocation6 + $0xe0] sm:$0xff]
    %v538 = vld [vmem:[#allocation6 + $0xe8] sm:$0xff]
    %v539 = vld [vmem:[#allocation6 + $0xf0] sm:$0xff]
    %v540 = vld [vmem:[#allocation6 + $0xf8] sm:$0xff]
    %v541 = vld [vmem:[%s2] sm:$0x1]
    %v543 = vlaneseq
    %v544 = vshrl.u32 %v543, 7
    %v545 = vsub.s32 0, %v544
    %v546 = vrot.slane %v541, %v545
    %548 = vmatprep.subr.mxu0 0.0
    %549 = vmatpush1.msra.mxu0 %v509
    %550 = vmatprep.subr.mxu0 0.0
    %551 = vmatpush1.msra.mxu0 %v510
    %552 = vmatprep.subr.mxu0 0.0
    %553 = vmatpush1.msra.mxu0 %v511
    %554 = vmatprep.subr.mxu0 0.0
    %555 = vmatpush1.msra.mxu0 %v512
    %556 = vmatprep.subr.mxu0 0.0
    %557 = vmatpush1.msra.mxu0 %v513
    %558 = vmatprep.subr.mxu0 0.0
    %559 = vmatpush1.msra.mxu0 %v514
    %560 = vmatprep.subr.mxu0 0.0
    %561 = vmatpush1.msra.mxu0 %v515
    %562 = vmatprep.subr.mxu0 0.0
    %563 = vmatpush1.msra.mxu0 %v516
    %564 = vmatprep.subr.mxu0 0.0
    %565 = vmatpush1.msra.mxu0 %v517
    %566 = vmatprep.subr.mxu0 0.0
    %567 = vmatpush1.msra.mxu0 %v518
    %568 = vmatprep.subr.mxu0 0.0
    %569 = vmatpush1.msra.mxu0 %v519
    %570 = vmatprep.subr.mxu0 0.0
    %571 = vmatpush1.msra.mxu0 %v520
    %572 = vmatprep.subr.mxu0 0.0
    %573 = vmatpush1.msra.mxu0 %v521
    %574 = vmatprep.subr.mxu0 0.0
    %575 = vmatpush1.msra.mxu0 %v522
    %576 = vmatprep.subr.mxu0 0.0
    %577 = vmatpush1.msra.mxu0 %v523
    %578 = vmatprep.subr.mxu0 0.0
    %579 = vmatpush1.msra.mxu0 %v524
    %580 = vmatprep.subr.mxu0 0.0
    %581 = vmatpush1.msra.mxu0 %v525
    %582 = vmatprep.subr.mxu0 0.0
    %583 = vmatpush1.msra.mxu0 %v526
    %584 = vmatprep.subr.mxu0 0.0
    %585 = vmatpush1.msra.mxu0 %v527
    %586 = vmatprep.subr.mxu0 0.0
    %587 = vmatpush1.msra.mxu0 %v528
    %588 = vmatprep.subr.mxu0 0.0
    %589 = vmatpush1.msra.mxu0 %v529
    %590 = vmatprep.subr.mxu0 0.0
    %591 = vmatpush1.msra.mxu0 %v530
    %592 = vmatprep.subr.mxu0 0.0
    %593 = vmatpush1.msra.mxu0 %v531
    %594 = vmatprep.subr.mxu0 0.0
    %595 = vmatpush1.msra.mxu0 %v532
    %596 = vmatprep.subr.mxu0 0.0
    %597 = vmatpush1.msra.mxu0 %v533
    %598 = vmatprep.subr.mxu0 0.0
    %599 = vmatpush1.msra.mxu0 %v534
    %600 = vmatprep.subr.mxu0 0.0
    %601 = vmatpush1.msra.mxu0 %v535
    %602 = vmatprep.subr.mxu0 0.0
    %603 = vmatpush1.msra.mxu0 %v536
    %604 = vmatprep.subr.mxu0 0.0
    %605 = vmatpush1.msra.mxu0 %v537
    %606 = vmatprep.subr.mxu0 0.0
    %607 = vmatpush1.msra.mxu0 %v538
    %608 = vmatprep.subr.mxu0 0.0
    %609 = vmatpush1.msra.mxu0 %v539
    %610 = vmatprep.subr.mxu0 0.0
    %611 = vmatpush1.msra.mxu0 %v540
    %612 = vmatprep.mubr.f32.mxu0 %v508
    %613 = vmatmul.mubr.f32.gmra.mrb[0].mxu0 %v507
    %v614 = vpop.f32.mrb[0].mxu0
    %v615 = vadd.f32 %v546, %v614
    %v616 = vpop.f32.mrb[0].mxu0
    %617 = vdwg.mxu0
    %v618 = vtanh.pop %v615
    %619 = vst [vmem:[#allocation2] sm:$0xff] %v618
    %s620 = scalar_lea.vmem [#allocation8], 32
    %621 = vst [vmem:[%s620] sm:$0xff] %v618
    %s622 = scalar_lea.vmem [#allocation3], 40
    %v623 = vld [vmem:[%s622] sm:$0xff]
    %v624 = vld [vmem:[#allocation2] sm:$0xff]
    %v625 = vld [vmem:[#allocation6] sm:$0xff]
    %v626 = vld [vmem:[#allocation6 + $0x8] sm:$0xff]
    %v627 = vld [vmem:[#allocation6 + $0x10] sm:$0xff]
    %v628 = vld [vmem:[#allocation6 + $0x18] sm:$0xff]
    %v629 = vld [vmem:[#allocation6 + $0x20] sm:$0xff]
    %v630 = vld [vmem:[#allocation6 + $0x28] sm:$0xff]
    %v631 = vld [vmem:[#allocation6 + $0x30] sm:$0xff]
    %v632 = vld [vmem:[#allocation6 + $0x38] sm:$0xff]
    %v633 = vld [vmem:[#allocation6 + $0x40] sm:$0xff]
    %v634 = vld [vmem:[#allocation6 + $0x48] sm:$0xff]
    %v635 = vld [vmem:[#allocation6 + $0x50] sm:$0xff]
    %v636 = vld [vmem:[#allocation6 + $0x58] sm:$0xff]
    %v637 = vld [vmem:[#allocation6 + $0x60] sm:$0xff]
    %v638 = vld [vmem:[#allocation6 + $0x68] sm:$0xff]
    %v639 = vld [vmem:[#allocation6 + $0x70] sm:$0xff]
    %v640 = vld [vmem:[#allocation6 + $0x78] sm:$0xff]
    %v641 = vld [vmem:[#allocation6 + $0x80] sm:$0xff]
    %v642 = vld [vmem:[#allocation6 + $0x88] sm:$0xff]
    %v643 = vld [vmem:[#allocation6 + $0x90] sm:$0xff]
    %v644 = vld [vmem:[#allocation6 + $0x98] sm:$0xff]
    %v645 = vld [vmem:[#allocation6 + $0xa0] sm:$0xff]
    %v646 = vld [vmem:[#allocation6 + $0xa8] sm:$0xff]
    %v647 = vld [vmem:[#allocation6 + $0xb0] sm:$0xff]
    %v648 = vld [vmem:[#allocation6 + $0xb8] sm:$0xff]
    %v649 = vld [vmem:[#allocation6 + $0xc0] sm:$0xff]
    %v650 = vld [vmem:[#allocation6 + $0xc8] sm:$0xff]
    %v651 = vld [vmem:[#allocation6 + $0xd0] sm:$0xff]
    %v652 = vld [vmem:[#allocation6 + $0xd8] sm:$0xff]
    %v653 = vld [vmem:[#allocation6 + $0xe0] sm:$0xff]
    %v654 = vld [vmem:[#allocation6 + $0xe8] sm:$0xff]
    %v655 = vld [vmem:[#allocation6 + $0xf0] sm:$0xff]
    %v656 = vld [vmem:[#allocation6 + $0xf8] sm:$0xff]
    %v657 = vld [vmem:[%s2] sm:$0x1]
    %v659 = vlaneseq
    %v660 = vshrl.u32 %v659, 7
    %v661 = vsub.s32 0, %v660
    %v662 = vrot.slane %v657, %v661
    %664 = vmatprep.subr.mxu0 0.0
    %665 = vmatpush1.msra.mxu0 %v625
    %666 = vmatprep.subr.mxu0 0.0
    %667 = vmatpush1.msra.mxu0 %v626
    %668 = vmatprep.subr.mxu0 0.0
    %669 = vmatpush1.msra.mxu0 %v627
    %670 = vmatprep.subr.mxu0 0.0
    %671 = vmatpush1.msra.mxu0 %v628
    %672 = vmatprep.subr.mxu0 0.0
    %673 = vmatpush1.msra.mxu0 %v629
    %674 = vmatprep.subr.mxu0 0.0
    %675 = vmatpush1.msra.mxu0 %v630
    %676 = vmatprep.subr.mxu0 0.0
    %677 = vmatpush1.msra.mxu0 %v631
    %678 = vmatprep.subr.mxu0 0.0
    %679 = vmatpush1.msra.mxu0 %v632
    %680 = vmatprep.subr.mxu0 0.0
    %681 = vmatpush1.msra.mxu0 %v633
    %682 = vmatprep.subr.mxu0 0.0
    %683 = vmatpush1.msra.mxu0 %v634
    %684 = vmatprep.subr.mxu0 0.0
    %685 = vmatpush1.msra.mxu0 %v635
    %686 = vmatprep.subr.mxu0 0.0
    %687 = vmatpush1.msra.mxu0 %v636
    %688 = vmatprep.subr.mxu0 0.0
    %689 = vmatpush1.msra.mxu0 %v637
    %690 = vmatprep.subr.mxu0 0.0
    %691 = vmatpush1.msra.mxu0 %v638
    %692 = vmatprep.subr.mxu0 0.0
    %693 = vmatpush1.msra.mxu0 %v639
    %694 = vmatprep.subr.mxu0 0.0
    %695 = vmatpush1.msra.mxu0 %v640
    %696 = vmatprep.subr.mxu0 0.0
    %697 = vmatpush1.msra.mxu0 %v641
    %698 = vmatprep.subr.mxu0 0.0
    %699 = vmatpush1.msra.mxu0 %v642
    %700 = vmatprep.subr.mxu0 0.0
    %701 = vmatpush1.msra.mxu0 %v643
    %702 = vmatprep.subr.mxu0 0.0
    %703 = vmatpush1.msra.mxu0 %v644
    %704 = vmatprep.subr.mxu0 0.0
    %705 = vmatpush1.msra.mxu0 %v645
    %706 = vmatprep.subr.mxu0 0.0
    %707 = vmatpush1.msra.mxu0 %v646
    %708 = vmatprep.subr.mxu0 0.0
    %709 = vmatpush1.msra.mxu0 %v647
    %710 = vmatprep.subr.mxu0 0.0
    %711 = vmatpush1.msra.mxu0 %v648
    %712 = vmatprep.subr.mxu0 0.0
    %713 = vmatpush1.msra.mxu0 %v649
    %714 = vmatprep.subr.mxu0 0.0
    %715 = vmatpush1.msra.mxu0 %v650
    %716 = vmatprep.subr.mxu0 0.0
    %717 = vmatpush1.msra.mxu0 %v651
    %718 = vmatprep.subr.mxu0 0.0
    %719 = vmatpush1.msra.mxu0 %v652
    %720 = vmatprep.subr.mxu0 0.0
    %721 = vmatpush1.msra.mxu0 %v653
    %722 = vmatprep.subr.mxu0 0.0
    %723 = vmatpush1.msra.mxu0 %v654
    %724 = vmatprep.subr.mxu0 0.0
    %725 = vmatpush1.msra.mxu0 %v655
    %726 = vmatprep.subr.mxu0 0.0
    %727 = vmatpush1.msra.mxu0 %v656
    %728 = vmatprep.mubr.f32.mxu0 %v624
    %729 = vmatmul.mubr.f32.gmra.mrb[0].mxu0 %v623
    %v730 = vpop.f32.mrb[0].mxu0
    %v731 = vadd.f32 %v662, %v730
    %v732 = vpop.f32.mrb[0].mxu0
    %733 = vdwg.mxu0
    %v734 = vtanh.pop %v731
    %735 = vst [vmem:[#allocation2] sm:$0xff] %v734
    %s736 = scalar_lea.vmem [#allocation8], 40
    %737 = vst [vmem:[%s736] sm:$0xff] %v734
    %s738 = scalar_lea.vmem [#allocation3], 48
    %v739 = vld [vmem:[%s738] sm:$0xff]
    %v740 = vld [vmem:[#allocation2] sm:$0xff]
    %v741 = vld [vmem:[#allocation6] sm:$0xff]
    %v742 = vld [vmem:[#allocation6 + $0x8] sm:$0xff]
    %v743 = vld [vmem:[#allocation6 + $0x10] sm:$0xff]
    %v744 = vld [vmem:[#allocation6 + $0x18] sm:$0xff]
    %v745 = vld [vmem:[#allocation6 + $0x20] sm:$0xff]
    %v746 = vld [vmem:[#allocation6 + $0x28] sm:$0xff]
    %v747 = vld [vmem:[#allocation6 + $0x30] sm:$0xff]
    %v748 = vld [vmem:[#allocation6 + $0x38] sm:$0xff]
    %v749 = vld [vmem:[#allocation6 + $0x40] sm:$0xff]
    %v750 = vld [vmem:[#allocation6 + $0x48] sm:$0xff]
    %v751 = vld [vmem:[#allocation6 + $0x50] sm:$0xff]
    %v752 = vld [vmem:[#allocation6 + $0x58] sm:$0xff]
    %v753 = vld [vmem:[#allocation6 + $0x60] sm:$0xff]
    %v754 = vld [vmem:[#allocation6 + $0x68] sm:$0xff]
    %v755 = vld [vmem:[#allocation6 + $0x70] sm:$0xff]
    %v756 = vld [vmem:[#allocation6 + $0x78] sm:$0xff]
    %v757 = vld [vmem:[#allocation6 + $0x80] sm:$0xff]
    %v758 = vld [vmem:[#allocation6 + $0x88] sm:$0xff]
    %v759 = vld [vmem:[#allocation6 + $0x90] sm:$0xff]
    %v760 = vld [vmem:[#allocation6 + $0x98] sm:$0xff]
    %v761 = vld [vmem:[#allocation6 + $0xa0] sm:$0xff]
    %v762 = vld [vmem:[#allocation6 + $0xa8] sm:$0xff]
    %v763 = vld [vmem:[#allocation6 + $0xb0] sm:$0xff]
    %v764 = vld [vmem:[#allocation6 + $0xb8] sm:$0xff]
    %v765 = vld [vmem:[#allocation6 + $0xc0] sm:$0xff]
    %v766 = vld [vmem:[#allocation6 + $0xc8] sm:$0xff]
    %v767 = vld [vmem:[#allocation6 + $0xd0] sm:$0xff]
    %v768 = vld [vmem:[#allocation6 + $0xd8] sm:$0xff]
    %v769 = vld [vmem:[#allocation6 + $0xe0] sm:$0xff]
    %v770 = vld [vmem:[#allocation6 + $0xe8] sm:$0xff]
    %v771 = vld [vmem:[#allocation6 + $0xf0] sm:$0xff]
    %v772 = vld [vmem:[#allocation6 + $0xf8] sm:$0xff]
    %v773 = vld [vmem:[%s2] sm:$0x1]
    %v775 = vlaneseq
    %v776 = vshrl.u32 %v775, 7
    %v777 = vsub.s32 0, %v776
    %v778 = vrot.slane %v773, %v777
    %780 = vmatprep.subr.mxu0 0.0
    %781 = vmatpush1.msra.mxu0 %v741
    %782 = vmatprep.subr.mxu0 0.0
    %783 = vmatpush1.msra.mxu0 %v742
    %784 = vmatprep.subr.mxu0 0.0
    %785 = vmatpush1.msra.mxu0 %v743
    %786 = vmatprep.subr.mxu0 0.0
    %787 = vmatpush1.msra.mxu0 %v744
    %788 = vmatprep.subr.mxu0 0.0
    %789 = vmatpush1.msra.mxu0 %v745
    %790 = vmatprep.subr.mxu0 0.0
    %791 = vmatpush1.msra.mxu0 %v746
    %792 = vmatprep.subr.mxu0 0.0
    %793 = vmatpush1.msra.mxu0 %v747
    %794 = vmatprep.subr.mxu0 0.0
    %795 = vmatpush1.msra.mxu0 %v748
    %796 = vmatprep.subr.mxu0 0.0
    %797 = vmatpush1.msra.mxu0 %v749
    %798 = vmatprep.subr.mxu0 0.0
    %799 = vmatpush1.msra.mxu0 %v750
    %800 = vmatprep.subr.mxu0 0.0
    %801 = vmatpush1.msra.mxu0 %v751
    %802 = vmatprep.subr.mxu0 0.0
    %803 = vmatpush1.msra.mxu0 %v752
    %804 = vmatprep.subr.mxu0 0.0
    %805 = vmatpush1.msra.mxu0 %v753
    %806 = vmatprep.subr.mxu0 0.0
    %807 = vmatpush1.msra.mxu0 %v754
    %808 = vmatprep.subr.mxu0 0.0
    %809 = vmatpush1.msra.mxu0 %v755
    %810 = vmatprep.subr.mxu0 0.0
    %811 = vmatpush1.msra.mxu0 %v756
    %812 = vmatprep.subr.mxu0 0.0
    %813 = vmatpush1.msra.mxu0 %v757
    %814 = vmatprep.subr.mxu0 0.0
    %815 = vmatpush1.msra.mxu0 %v758
    %816 = vmatprep.subr.mxu0 0.0
    %817 = vmatpush1.msra.mxu0 %v759
    %818 = vmatprep.subr.mxu0 0.0
    %819 = vmatpush1.msra.mxu0 %v760
    %820 = vmatprep.subr.mxu0 0.0
    %821 = vmatpush1.msra.mxu0 %v761
    %822 = vmatprep.subr.mxu0 0.0
    %823 = vmatpush1.msra.mxu0 %v762
    %824 = vmatprep.subr.mxu0 0.0
    %825 = vmatpush1.msra.mxu0 %v763
    %826 = vmatprep.subr.mxu0 0.0
    %827 = vmatpush1.msra.mxu0 %v764
    %828 = vmatprep.subr.mxu0 0.0
    %829 = vmatpush1.msra.mxu0 %v765
    %830 = vmatprep.subr.mxu0 0.0
    %831 = vmatpush1.msra.mxu0 %v766
    %832 = vmatprep.subr.mxu0 0.0
    %833 = vmatpush1.msra.mxu0 %v767
    %834 = vmatprep.subr.mxu0 0.0
    %835 = vmatpush1.msra.mxu0 %v768
    %836 = vmatprep.subr.mxu0 0.0
    %837 = vmatpush1.msra.mxu0 %v769
    %838 = vmatprep.subr.mxu0 0.0
    %839 = vmatpush1.msra.mxu0 %v770
    %840 = vmatprep.subr.mxu0 0.0
    %841 = vmatpush1.msra.mxu0 %v771
    %842 = vmatprep.subr.mxu0 0.0
    %843 = vmatpush1.msra.mxu0 %v772
    %844 = vmatprep.mubr.f32.mxu0 %v740
    %845 = vmatmul.mubr.f32.gmra.mrb[0].mxu0 %v739
    %v846 = vpop.f32.mrb[0].mxu0
    %v847 = vadd.f32 %v778, %v846
    %v848 = vpop.f32.mrb[0].mxu0
    %849 = vdwg.mxu0
    %v850 = vtanh.pop %v847
    %851 = vst [vmem:[#allocation2] sm:$0xff] %v850
    %s852 = scalar_lea.vmem [#allocation8], 48
    %853 = vst [vmem:[%s852] sm:$0xff] %v850
    %s854 = scalar_lea.vmem [#allocation3], 56
    %v855 = vld [vmem:[%s854] sm:$0xff]
    %v856 = vld [vmem:[#allocation2] sm:$0xff]
    %v857 = vld [vmem:[#allocation6] sm:$0xff]
    %v858 = vld [vmem:[#allocation6 + $0x8] sm:$0xff]
    %v859 = vld [vmem:[#allocation6 + $0x10] sm:$0xff]
    %v860 = vld [vmem:[#allocation6 + $0x18] sm:$0xff]
    %v861 = vld [vmem:[#allocation6 + $0x20] sm:$0xff]
    %v862 = vld [vmem:[#allocation6 + $0x28] sm:$0xff]
    %v863 = vld [vmem:[#allocation6 + $0x30] sm:$0xff]
    %v864 = vld [vmem:[#allocation6 + $0x38] sm:$0xff]
    %v865 = vld [vmem:[#allocation6 + $0x40] sm:$0xff]
    %v866 = vld [vmem:[#allocation6 + $0x48] sm:$0xff]
    %v867 = vld [vmem:[#allocation6 + $0x50] sm:$0xff]
    %v868 = vld [vmem:[#allocation6 + $0x58] sm:$0xff]
    %v869 = vld [vmem:[#allocation6 + $0x60] sm:$0xff]
    %v870 = vld [vmem:[#allocation6 + $0x68] sm:$0xff]
    %v871 = vld [vmem:[#allocation6 + $0x70] sm:$0xff]
    %v872 = vld [vmem:[#allocation6 + $0x78] sm:$0xff]
    %v873 = vld [vmem:[#allocation6 + $0x80] sm:$0xff]
    %v874 = vld [vmem:[#allocation6 + $0x88] sm:$0xff]
    %v875 = vld [vmem:[#allocation6 + $0x90] sm:$0xff]
    %v876 = vld [vmem:[#allocation6 + $0x98] sm:$0xff]
    %v877 = vld [vmem:[#allocation6 + $0xa0] sm:$0xff]
    %v878 = vld [vmem:[#allocation6 + $0xa8] sm:$0xff]
    %v879 = vld [vmem:[#allocation6 + $0xb0] sm:$0xff]
    %v880 = vld [vmem:[#allocation6 + $0xb8] sm:$0xff]
    %v881 = vld [vmem:[#allocation6 + $0xc0] sm:$0xff]
    %v882 = vld [vmem:[#allocation6 + $0xc8] sm:$0xff]
    %v883 = vld [vmem:[#allocation6 + $0xd0] sm:$0xff]
    %v884 = vld [vmem:[#allocation6 + $0xd8] sm:$0xff]
    %v885 = vld [vmem:[#allocation6 + $0xe0] sm:$0xff]
    %v886 = vld [vmem:[#allocation6 + $0xe8] sm:$0xff]
    %v887 = vld [vmem:[#allocation6 + $0xf0] sm:$0xff]
    %v888 = vld [vmem:[#allocation6 + $0xf8] sm:$0xff]
    %v889 = vld [vmem:[%s2] sm:$0x1]
    %v891 = vlaneseq
    %v892 = vshrl.u32 %v891, 7
    %v893 = vsub.s32 0, %v892
    %v894 = vrot.slane %v889, %v893
    %896 = vmatprep.subr.mxu0 0.0
    %897 = vmatpush1.msra.mxu0 %v857
    %898 = vmatprep.subr.mxu0 0.0
    %899 = vmatpush1.msra.mxu0 %v858
    %900 = vmatprep.subr.mxu0 0.0
    %901 = vmatpush1.msra.mxu0 %v859
    %902 = vmatprep.subr.mxu0 0.0
    %903 = vmatpush1.msra.mxu0 %v860
    %904 = vmatprep.subr.mxu0 0.0
    %905 = vmatpush1.msra.mxu0 %v861
    %906 = vmatprep.subr.mxu0 0.0
    %907 = vmatpush1.msra.mxu0 %v862
    %908 = vmatprep.subr.mxu0 0.0
    %909 = vmatpush1.msra.mxu0 %v863
    %910 = vmatprep.subr.mxu0 0.0
    %911 = vmatpush1.msra.mxu0 %v864
    %912 = vmatprep.subr.mxu0 0.0
    %913 = vmatpush1.msra.mxu0 %v865
    %914 = vmatprep.subr.mxu0 0.0
    %915 = vmatpush1.msra.mxu0 %v866
    %916 = vmatprep.subr.mxu0 0.0
    %917 = vmatpush1.msra.mxu0 %v867
    %918 = vmatprep.subr.mxu0 0.0
    %919 = vmatpush1.msra.mxu0 %v868
    %920 = vmatprep.subr.mxu0 0.0
    %921 = vmatpush1.msra.mxu0 %v869
    %922 = vmatprep.subr.mxu0 0.0
    %923 = vmatpush1.msra.mxu0 %v870
    %924 = vmatprep.subr.mxu0 0.0
    %925 = vmatpush1.msra.mxu0 %v871
    %926 = vmatprep.subr.mxu0 0.0
    %927 = vmatpush1.msra.mxu0 %v872
    %928 = vmatprep.subr.mxu0 0.0
    %929 = vmatpush1.msra.mxu0 %v873
    %930 = vmatprep.subr.mxu0 0.0
    %931 = vmatpush1.msra.mxu0 %v874
    %932 = vmatprep.subr.mxu0 0.0
    %933 = vmatpush1.msra.mxu0 %v875
    %934 = vmatprep.subr.mxu0 0.0
    %935 = vmatpush1.msra.mxu0 %v876
    %936 = vmatprep.subr.mxu0 0.0
    %937 = vmatpush1.msra.mxu0 %v877
    %938 = vmatprep.subr.mxu0 0.0
    %939 = vmatpush1.msra.mxu0 %v878
    %940 = vmatprep.subr.mxu0 0.0
    %941 = vmatpush1.msra.mxu0 %v879
    %942 = vmatprep.subr.mxu0 0.0
    %943 = vmatpush1.msra.mxu0 %v880
    %944 = vmatprep.subr.mxu0 0.0
    %945 = vmatpush1.msra.mxu0 %v881
    %946 = vmatprep.subr.mxu0 0.0
    %947 = vmatpush1.msra.mxu0 %v882
    %948 = vmatprep.subr.mxu0 0.0
    %949 = vmatpush1.msra.mxu0 %v883
    %950 = vmatprep.subr.mxu0 0.0
    %951 = vmatpush1.msra.mxu0 %v884
    %952 = vmatprep.subr.mxu0 0.0
    %953 = vmatpush1.msra.mxu0 %v885
    %954 = vmatprep.subr.mxu0 0.0
    %955 = vmatpush1.msra.mxu0 %v886
    %956 = vmatprep.subr.mxu0 0.0
    %957 = vmatpush1.msra.mxu0 %v887
    %958 = vmatprep.subr.mxu0 0.0
    %959 = vmatpush1.msra.mxu0 %v888
    %960 = vmatprep.mubr.f32.mxu0 %v856
    %961 = vmatmul.mubr.f32.gmra.mrb[0].mxu0 %v855
    %v962 = vpop.f32.mrb[0].mxu0
    %v963 = vadd.f32 %v894, %v962
    %v964 = vpop.f32.mrb[0].mxu0
    %965 = vdwg.mxu0
    %v966 = vtanh.pop %v963
    %967 = vst [vmem:[#allocation2] sm:$0xff] %v966
    %s968 = scalar_lea.vmem [#allocation8], 56
    %969 = vst [vmem:[%s968] sm:$0xff] %v966
    // Predicated region
    $region22: #{tpu_custom_call.1} parent=1 // pred_check
      _
    $region23: #{tpu_custom_call.1} parent=1 // pred_check_branch
      %971 = sbr.rel (0) target = $region25
    $region24: #{tpu_custom_call.1} parent=1 // pred_region
      %s973 = ssub.s32 1024, 1024
      %974 = vsyncadd [#allocation5], %s973
      %s975 = sshll.u32 [#allocation8], 4
      %s976 = int_to_ptr.vmem [resolvable:$true] %s975
      %981 = dma.vmem_to_hbm [thread:$0]  %s976, 1024, %s3, [#allocation5], 128, 128, 8
    $region25: #{tpu_custom_call.1} parent=1 // pred_fallthru
      _
    // Predicated region
    $region26: #{tpu_custom_call.1} parent=1 // pred_check
      _
    $region27: #{tpu_custom_call.1} parent=1 // pred_check_branch
      %983 = sbr.rel (0) target = $region29
    $region28: #{tpu_custom_call.1} parent=1 // pred_region
      %984 = dma.done [#allocation5], 1024
    $region29: #{tpu_custom_call.1} parent=1 // pred_fallthru
      _
    %985 = vsyncpa [#allocation4], 1
    %986 = vsyncpa [#allocation7], 1
    %987 = vsyncpa [#allocation5], 1

</llo_original>
